<compile_context>
chip_gen: v6e
topology: v6e:2x2x1
jax: 0.10.0
libtpu: 0.0.40
codegen_flags: <defaults>
</compile_context>

<pallas_src>
import jax
import jax.numpy as jnp
from jax.experimental import pallas as pl
from jax.experimental.pallas import tpu as pltpu

# Below ~1 MiB the fixed pallas_call launch overhead dominates the copy itself.
_FAST_PATH_BYTES = 1 << 20


def _hbm_copy_kernel(x_hbm, o_hbm, sem):
    # Single whole-array HBM->HBM DMA: no VMEM staging, no vector-unit work.
    cp = pltpu.make_async_copy(x_hbm, o_hbm, sem)
    cp.start()
    cp.wait()


def _pallas_hbm_copy(x: jnp.ndarray) -> jnp.ndarray:
    return pl.pallas_call(
        _hbm_copy_kernel,
        out_shape=jax.ShapeDtypeStruct(x.shape, x.dtype),
        in_specs=[pl.BlockSpec(memory_space=pl.ANY)],
        out_specs=pl.BlockSpec(memory_space=pl.ANY),
        scratch_shapes=[pltpu.SemaphoreType.DMA],
    )(x)


def pallas_identity(x: jnp.ndarray, *, force_pallas: bool = False) -> jnp.ndarray:
    """Materialized identity copy of an arbitrary tensor via HBM->HBM DMA."""
    if x.size == 0:
        return x
    if not force_pallas and x.size * x.dtype.itemsize < _FAST_PATH_BYTES:
        # Module semantics are pass-through, so returning the input is exact
        # and avoids the kernel launch overhead for tiny tensors.
        return x
    # TODO(synk): when the caller can donate `x`, input_output_aliases={0: 0}
    # would avoid allocating a second HBM buffer for the "copy" entirely.
    return _pallas_hbm_copy(x)


class DummyMapPallas:
    """JAX/Pallas equivalent of pcdet DummyMap.

    The PyTorch forward is `return batch_dict` — no parameters, no compute.
    By default we preserve that exactly (no copy, zero HBM traffic), which is
    the performance-optimal choice.  Set `materialize_copy=True` to route the
    BEV feature tensor through the Pallas HBM->HBM copy kernel instead.
    NUM_BEV_FEATURES is retained as metadata only.
    """

    def __init__(self, num_bev_features: int, materialize_copy: bool = False):
        self.num_bev_features = num_bev_features
        self.materialize_copy = materialize_copy

    def forward(self, batch_dict: dict) -> dict:
        if self.materialize_copy and "spatial_features" in batch_dict:
            batch_dict["spatial_features"] = pallas_identity(
                batch_dict["spatial_features"]
            )
        return batch_dict


if __name__ == "__main__":
    key = jax.random.PRNGKey(0)
    # Small NCHW BEV feature map: batch=2, channels=4, H=W=16.
    x = jax.random.normal(key, (2, 4, 16, 16), dtype=jnp.float32)

    # Default path: exact PyTorch semantics — pure pass-through, zero copies.
    module = DummyMapPallas(num_bev_features=4)
    batch_dict = {"spatial_features": x, "batch_size": 2}
    out = module.forward(batch_dict)
    assert out is batch_dict
    assert out["spatial_features"] is x
    assert out["batch_size"] == 2

    # Exercise the Pallas HBM->HBM DMA copy kernel once (force past the
    # small-tensor fast path): the copy must be bit-exact and shape/dtype
    # preserving.
    y = jax.block_until_ready(pallas_identity(x, force_pallas=True))
    assert y.shape == x.shape and y.dtype == x.dtype
    assert bool(jnp.array_equal(y, x, equal_nan=True))

    print("KERNEL_OK")
</pallas_src>

<mosaic_0001>
module attributes {stable_mosaic.version = 11 : i64} {
  func.func @_hbm_copy_kernel(%arg0: memref<2x4x16x16xf32, #tpu.memory_space<any>>, %arg1: memref<2x4x16x16xf32, #tpu.memory_space<any>>, %arg2: memref<!tpu.dma_semaphore, #tpu.memory_space<semaphore_mem>>) attributes {dimension_semantics = [], scalar_prefetch = 0 : i64, scratch_operands = 1 : i64, tpu.core_type = #tpu.core_type<tc>} {
    tpu.enqueue_dma source(%arg0 : memref<2x4x16x16xf32, #tpu.memory_space<any>>) target(%arg1 : memref<2x4x16x16xf32, #tpu.memory_space<any>>) target_semaphore(%arg2 : memref<!tpu.dma_semaphore, #tpu.memory_space<semaphore_mem>>)
    tpu.wait_dma2 semaphore(%arg2 : memref<!tpu.dma_semaphore, #tpu.memory_space<semaphore_mem>>) src(%arg0 : memref<2x4x16x16xf32, #tpu.memory_space<any>>) dst(%arg1 : memref<2x4x16x16xf32, #tpu.memory_space<any>>)
    return
  }
}

</mosaic_0001>

<llo_original>
// kernel: tpu_custom_call.1
$region0: #{tpu_custom_call.1}
  #allocation0 [shape = 'u32[]', space=smem, size = 0x4, offset = 0x4, fixed_abs, tag = 'smem constant byte address 0x4 - core index']
  #allocation1 [shape = 'u32[144,128]{1,0:T(1,128)}', space=vmem, size = 0x12000, scoped, tag = 'internal scratch']
  #allocation2 [shape = 's32[1]{0}', space=sflag, size = 0x4, scoped, tag = 'scratch operand']
  #allocation3 [shape = 's32[]', space=sflag, size = 0x4, offset = 0, fixed_abs, tag = 'sflag constant byte address 0x0 - dummy sync flag']
  #allocation4 [shape = 'u32[0]{0}', space=smem, size = 0, offset = 0, fixed_abs, tag = 'smem constant byte address 0x0 - null']
  %s0 = inlined_call_operand.hbm [shape: f32[2,4,16,16], index: 0, kind: input, shape index: {}]
  %s1 = inlined_call_operand.hbm [shape: f32[2,4,16,16], index: 1, kind: output, shape index: {}]
  %s2 = sld [smem:[#allocation0]]
  $region2: #{tpu_custom_call.1} parent=0
    _
  %s4 = ssub.s32 1, %s2
  %s5 = scalar_select 0, %s4, %s2
  %s7 = sshll.u32 1, 14
  %s8 = sxor.u32 4294967295, %s7
  %12 = dma.general %s0, 2048, %s1, [#allocation2], 131072, [#allocation4], 0, 0
  %s13 = smul.u32 2, 4
  %s14 = smul.u32 %s13, 16
  %s15 = smul.u32 %s14, 1
  %s16 = sshll.u32 %s15, 4
  %17 = dma.done [#allocation2], %s16
  %18 = vsyncmov [#allocation2]
  %s19 = vpop.sfrf %18
  %p20 = scmp.eq.s32.totalorder %s19, 0
  %p21 = pneg %p20
  %23 = shalt.err (%p21)

</llo_original>
